<compile_context>
chip_gen: v7x
topology: tpu7x:2x2x1
jax: 0.10.0
libtpu: 0.0.40
codegen_flags: <defaults>
</compile_context>

<pallas_src>
from functools import partial

import jax
import jax.numpy as jnp
from jax import lax
from jax.experimental import pallas as pl
from jax.experimental.pallas import tpu as pltpu

EPS = 1e-5
LANE = 128     # lane width: weight/output feature dims padded to this (prep-time)
SUBLANE = 8    # f32 sublane count: batch padded to a multiple of this (in-jit)


def _round_up(n, m):
    return ((n + m - 1) // m) * m


def _pad2d(a, rows, cols):
    return jnp.pad(a, ((0, rows - a.shape[0]), (0, cols - a.shape[1])))


def _make_kernel(n_real, hp, op, need_row_mask):
    """Build the fused kernel; n_real / hp / op / need_row_mask are trace-time constants."""
    inv_n = 1.0 / float(n_real)

    def kernel(x_ref, w1_ref, w2_ref, w3_ref, vec_ref, o_ref):
        # x arrives unpadded in the feature dim (full-array block); cast to bf16 for the MXU.
        x = x_ref[...].astype(jnp.bfloat16)                  # (Bp, inp_dim)

        # Packed per-feature vectors: one (8, Vp) f32 tile, one DMA.
        # Zero-padding of the unused lanes/rows is load-bearing: padded feature
        # columns get gamma = beta = 0, so scale = shift = 0 and they stay exactly 0
        # through BN+ReLU (and multiply zero rows of the next weight matrix).
        vecs = vec_ref[...]
        g1 = vecs[0:1, :hp]
        be1 = vecs[1:2, :hp]
        g2 = vecs[2:3, :hp]
        be2 = vecs[3:4, :hp]
        b3 = vecs[4:5, :op]

        if need_row_mask:
            row = lax.broadcasted_iota(jnp.int32, (x.shape[0], 1), 0)
            rmask = (row < n_real).astype(jnp.float32)

        def bn_relu(h, gamma, beta):
            # Training-mode BatchNorm1d (biased variance) fused to scale/shift.
            # Padded batch rows of `h` are exactly zero (x padded with zeros, no bias),
            # so plain sums with a 1/n_real divisor give exact batch statistics.
            s = jnp.sum(h, axis=0, keepdims=True)
            sq = jnp.sum(h * h, axis=0, keepdims=True)
            mean = s * inv_n
            var = jnp.maximum(sq * inv_n - mean * mean, 0.0)  # clamp f32 cancellation
            scale = gamma * lax.rsqrt(var + EPS)              # rsqrt -> EUP (free slot)
            shift = beta - mean * scale
            out = jnp.maximum(h * scale + shift, 0.0)
            if need_row_mask:
                out = out * rmask                             # re-zero padded batch rows
            return out

        # Layer 1: Linear (bias cancels in BN) -> BN -> ReLU
        h = jnp.dot(x, w1_ref[...], preferred_element_type=jnp.float32)
        h = bn_relu(h, g1, be1)

        # Layer 2: Linear (bias cancels in BN) -> BN -> ReLU
        h = jnp.dot(h.astype(jnp.bfloat16), w2_ref[...],
                    preferred_element_type=jnp.float32)
        h = bn_relu(h, g2, be2)

        # Layer 3: Linear (bias kept)
        out = jnp.dot(h.astype(jnp.bfloat16), w3_ref[...],
                      preferred_element_type=jnp.float32) + b3
        o_ref[...] = out.astype(o_ref.dtype)

    return kernel


def prepare_params(params):
    """One-time parameter prep: pad to lane-dense shapes, cast weights to bf16,
    pack the five per-feature vectors into a single (8, Vp) f32 array.
    Call once and reuse the result across forward calls."""
    (w1, b1, g1, be1, w2, b2, g2, be2, w3, b3) = params
    del b1, b2  # exact cancellation under training-mode BatchNorm

    inp_dim, hidden_dim = w1.shape
    out_dim = w3.shape[1]
    Hp = _round_up(hidden_dim, LANE)
    Op = _round_up(out_dim, LANE)
    Vp = max(Hp, Op)

    # K dim of w1 left at inp_dim (full-array block; Mosaic pads the matmul K in VMEM).
    w1p = _pad2d(w1, inp_dim, Hp).astype(jnp.bfloat16)
    w2p = _pad2d(w2, Hp, Hp).astype(jnp.bfloat16)
    w3p = _pad2d(w3, Hp, Op).astype(jnp.bfloat16)

    vecs = jnp.zeros((SUBLANE, Vp), jnp.float32)
    vecs = vecs.at[0, :hidden_dim].set(g1[0])
    vecs = vecs.at[1, :hidden_dim].set(be1[0])
    vecs = vecs.at[2, :hidden_dim].set(g2[0])
    vecs = vecs.at[3, :hidden_dim].set(be2[0])
    vecs = vecs.at[4, :out_dim].set(b3[0])

    return (w1p, w2p, w3p, vecs)


@partial(jax.jit, static_argnames=("out_dim",))
def mlp_init_forward(x, prepped, *, out_dim):
    """Fused forward. `prepped` is the output of prepare_params (padded/cast once)."""
    w1p, w2p, w3p, vecs = prepped
    B, inp_dim = x.shape
    Hp = w2p.shape[0]
    Op = w3p.shape[1]
    Bp = _round_up(B, SUBLANE)

    # Only per-call host-side op (and only when B % 8 != 0); fused under this jit.
    xp = x if Bp == B else jnp.pad(x, ((0, Bp - B), (0, 0)))

    kernel = _make_kernel(n_real=B, hp=Hp, op=Op, need_row_mask=(Bp != B))

    vmem = pl.BlockSpec(memory_space=pltpu.MemorySpace.VMEM)
    flops = 2 * Bp * (inp_dim * Hp + Hp * Hp + Hp * Op) + 8 * Bp * Hp
    bytes_accessed = (xp.size * 4 + w1p.size * 2 + w2p.size * 2 + w3p.size * 2
                      + vecs.size * 4 + Bp * Op * 4)

    # TODO(synk): for large B, switch to a batch-tiled grid (tm=256 on v6e/v7x with a
    # "parallel" batch axis for v7x's two TensorCores, tm=128 on v5e) with a two-pass
    # accumulate-stats/apply BatchNorm; per-block stats are only exact because the
    # whole batch is a single block here.
    out_padded = pl.pallas_call(
        kernel,
        out_shape=jax.ShapeDtypeStruct((Bp, Op), jnp.float32),
        in_specs=[vmem] * 5,
        out_specs=vmem,
        cost_estimate=pl.CostEstimate(flops=flops, transcendentals=2 * Hp,
                                      bytes_accessed=bytes_accessed),
    )(xp, w1p, w2p, w3p, vecs)

    return out_padded[:B, :out_dim]


def make_params(key, inp_dim, hidden_dim, out_dim):
    """Deterministic synthetic parameters (shapes match nn.Linear / BatchNorm1d)."""
    ks = jax.random.split(key, 6)
    # Linear weights stored as (in, out) = transpose of torch's (out, in).
    w1 = jax.random.normal(ks[0], (inp_dim, hidden_dim), jnp.float32) / jnp.sqrt(inp_dim)
    b1 = jax.random.normal(ks[1], (1, hidden_dim), jnp.float32) * 0.1
    w2 = jax.random.normal(ks[2], (hidden_dim, hidden_dim), jnp.float32) / jnp.sqrt(hidden_dim)
    b2 = jax.random.normal(ks[3], (1, hidden_dim), jnp.float32) * 0.1
    w3 = jax.random.normal(ks[4], (hidden_dim, out_dim), jnp.float32) / jnp.sqrt(hidden_dim)
    b3 = jax.random.normal(ks[5], (1, out_dim), jnp.float32) * 0.1
    # BatchNorm1d affine params: gamma init 1, beta init 0 (as in torch).
    g1 = jnp.ones((1, hidden_dim), jnp.float32)
    be1 = jnp.zeros((1, hidden_dim), jnp.float32)
    g2 = jnp.ones((1, hidden_dim), jnp.float32)
    be2 = jnp.zeros((1, hidden_dim), jnp.float32)
    return (w1, b1, g1, be1, w2, b2, g2, be2, w3, b3)


def reference_forward_f32(x, params):
    """Plain-JAX f32 reference matching the PyTorch forward (training-mode BN, with biases)."""
    (w1, b1, g1, be1, w2, b2, g2, be2, w3, b3) = params

    def bn_relu(h, g, b):
        m = jnp.mean(h, axis=0, keepdims=True)
        v = jnp.mean((h - m) ** 2, axis=0, keepdims=True)
        return jnp.maximum((h - m) / jnp.sqrt(v + EPS) * g + b, 0.0)

    h = bn_relu(x @ w1 + b1, g1, be1)
    h = bn_relu(h @ w2 + b2, g2, be2)
    return h @ w3 + b3


def reference_forward_matched(x, params):
    """Reference with the kernel's numerics (bf16 matmuls, fused BN, biases 1/2 dropped)."""
    (w1, b1, g1, be1, w2, b2, g2, be2, w3, b3) = params
    bf = jnp.bfloat16
    n = x.shape[0]

    def bn_relu(h, g, b):
        mean = jnp.sum(h, axis=0, keepdims=True) / n
        var = jnp.maximum(jnp.sum(h * h, axis=0, keepdims=True) / n - mean * mean, 0.0)
        scale = g * lax.rsqrt(var + EPS)
        shift = b - mean * scale
        return jnp.maximum(h * scale + shift, 0.0)

    h = jnp.dot(x.astype(bf), w1.astype(bf), preferred_element_type=jnp.float32)
    h = bn_relu(h, g1, be1)
    h = jnp.dot(h.astype(bf), w2.astype(bf), preferred_element_type=jnp.float32)
    h = bn_relu(h, g2, be2)
    return jnp.dot(h.astype(bf), w3.astype(bf), preferred_element_type=jnp.float32) + b3


if __name__ == "__main__":
    key = jax.random.PRNGKey(0)
    k_x, k_p = jax.random.split(key)

    batch, inp_dim, hidden_dim, out_dim = 8, 16, 32, 8
    x = jax.random.normal(k_x, (batch, inp_dim), jnp.float32)
    params = make_params(k_p, inp_dim, hidden_dim, out_dim)

    prepped = prepare_params(params)              # one-time pad/cast/pack, off the hot path
    out = mlp_init_forward(x, prepped, out_dim=out_dim)
    out = jax.block_until_ready(out)
    assert out.shape == (batch, out_dim)

    # Implementation check: same numerics as the kernel (bf16 matmuls) -> tight.
    ref_matched = reference_forward_matched(x, params)
    assert jnp.allclose(out, ref_matched, atol=2e-3, rtol=2e-3), \
        "mismatch vs matched-precision JAX reference"

    # Spec fidelity check: full-precision PyTorch-semantics reference -> bf16 tolerance.
    ref_f32 = reference_forward_f32(x, params)
    assert jnp.allclose(out, ref_f32, atol=5e-2, rtol=5e-2), \
        "mismatch vs f32 PyTorch-semantics reference"

    print("KERNEL_OK")
</pallas_src>

<mosaic_0001>
module attributes {stable_mosaic.version = 11 : i64} {
  func.func @kernel(%arg0: memref<8x16xf32, #tpu.memory_space<vmem>>, %arg1: memref<16x128xbf16, #tpu.memory_space<vmem>>, %arg2: memref<128x128xbf16, #tpu.memory_space<vmem>>, %arg3: memref<128x128xbf16, #tpu.memory_space<vmem>>, %arg4: memref<8x128xf32, #tpu.memory_space<vmem>>, %arg5: memref<8x128xf32, #tpu.memory_space<vmem>>) attributes {dimension_semantics = [], scalar_prefetch = 0 : i64, scratch_operands = 0 : i64, tpu.core_type = #tpu.core_type<tc>} {
    %c0 = arith.constant 0 : index
    %c0_0 = arith.constant 0 : index
    %0 = vector.load %arg0[%c0, %c0_0] : memref<8x16xf32, #tpu.memory_space<vmem>>, vector<8x16xf32>
    %1 = arith.truncf %0 : vector<8x16xf32> to vector<8x16xbf16>
    %c0_1 = arith.constant 0 : index
    %c0_2 = arith.constant 0 : index
    %2 = vector.load %arg4[%c0_1, %c0_2] : memref<8x128xf32, #tpu.memory_space<vmem>>, vector<8x128xf32>
    %3 = vector.extract_strided_slice %2 {offsets = [0, 0], sizes = [1, 128], strides = [1, 1]} : vector<8x128xf32> to vector<1x128xf32>
    %4 = vector.extract_strided_slice %2 {offsets = [1, 0], sizes = [1, 128], strides = [1, 1]} : vector<8x128xf32> to vector<1x128xf32>
    %5 = vector.extract_strided_slice %2 {offsets = [2, 0], sizes = [1, 128], strides = [1, 1]} : vector<8x128xf32> to vector<1x128xf32>
    %6 = vector.extract_strided_slice %2 {offsets = [3, 0], sizes = [1, 128], strides = [1, 1]} : vector<8x128xf32> to vector<1x128xf32>
    %7 = vector.extract_strided_slice %2 {offsets = [4, 0], sizes = [1, 128], strides = [1, 1]} : vector<8x128xf32> to vector<1x128xf32>
    %c0_3 = arith.constant 0 : index
    %c0_4 = arith.constant 0 : index
    %8 = vector.load %arg1[%c0_3, %c0_4] : memref<16x128xbf16, #tpu.memory_space<vmem>>, vector<16x128xbf16>
    %cst = arith.constant dense<0.000000e+00> : vector<8x128xf32>
    %9 = tpu.matmul %1, %8, %cst {dimension_numbers = #tpu.dot_dimension_numbers<[1], [0], [0], [1], [0, 0, 1, 1], [], []>} : vector<8x16xbf16>, vector<16x128xbf16>, vector<8x128xf32> -> vector<8x128xf32>
    %cst_5 = arith.constant dense<0.000000e+00> : vector<128xf32>
    %10 = vector.multi_reduction <add>, %9, %cst_5 [0] : vector<8x128xf32> to vector<128xf32>
    %11 = vector.shape_cast %10 : vector<128xf32> to vector<1x128xf32>
    %12 = arith.mulf %9, %9 : vector<8x128xf32>
    %cst_6 = arith.constant dense<0.000000e+00> : vector<128xf32>
    %13 = vector.multi_reduction <add>, %12, %cst_6 [0] : vector<8x128xf32> to vector<128xf32>
    %14 = vector.shape_cast %13 : vector<128xf32> to vector<1x128xf32>
    %cst_7 = arith.constant 1.250000e-01 : f32
    %15 = vector.broadcast %cst_7 : f32 to vector<1x128xf32>
    %16 = arith.mulf %11, %15 : vector<1x128xf32>
    %cst_8 = arith.constant 1.250000e-01 : f32
    %17 = vector.broadcast %cst_8 : f32 to vector<1x128xf32>
    %18 = arith.mulf %14, %17 : vector<1x128xf32>
    %19 = arith.mulf %16, %16 : vector<1x128xf32>
    %20 = arith.subf %18, %19 : vector<1x128xf32>
    %cst_9 = arith.constant 0.000000e+00 : f32
    %21 = vector.broadcast %cst_9 : f32 to vector<1x128xf32>
    %22 = arith.maximumf %20, %21 : vector<1x128xf32>
    %cst_10 = arith.constant 9.99999974E-6 : f32
    %23 = vector.broadcast %cst_10 : f32 to vector<1x128xf32>
    %24 = arith.addf %22, %23 : vector<1x128xf32>
    %25 = math.rsqrt %24 : vector<1x128xf32>
    %26 = arith.mulf %3, %25 : vector<1x128xf32>
    %27 = arith.mulf %16, %26 : vector<1x128xf32>
    %28 = arith.subf %4, %27 : vector<1x128xf32>
    %29 = vector.broadcast %26 : vector<1x128xf32> to vector<8x128xf32>
    %30 = arith.mulf %9, %29 : vector<8x128xf32>
    %31 = vector.broadcast %28 : vector<1x128xf32> to vector<8x128xf32>
    %32 = arith.addf %30, %31 : vector<8x128xf32>
    %cst_11 = arith.constant 0.000000e+00 : f32
    %33 = vector.broadcast %cst_11 : f32 to vector<8x128xf32>
    %34 = arith.maximumf %32, %33 : vector<8x128xf32>
    %35 = arith.truncf %34 : vector<8x128xf32> to vector<8x128xbf16>
    %c0_12 = arith.constant 0 : index
    %c0_13 = arith.constant 0 : index
    %36 = vector.load %arg2[%c0_12, %c0_13] : memref<128x128xbf16, #tpu.memory_space<vmem>>, vector<128x128xbf16>
    %cst_14 = arith.constant dense<0.000000e+00> : vector<8x128xf32>
    %37 = tpu.matmul %35, %36, %cst_14 {dimension_numbers = #tpu.dot_dimension_numbers<[1], [0], [0], [1], [0, 0, 1, 1], [], []>} : vector<8x128xbf16>, vector<128x128xbf16>, vector<8x128xf32> -> vector<8x128xf32>
    %cst_15 = arith.constant dense<0.000000e+00> : vector<128xf32>
    %38 = vector.multi_reduction <add>, %37, %cst_15 [0] : vector<8x128xf32> to vector<128xf32>
    %39 = vector.shape_cast %38 : vector<128xf32> to vector<1x128xf32>
    %40 = arith.mulf %37, %37 : vector<8x128xf32>
    %cst_16 = arith.constant dense<0.000000e+00> : vector<128xf32>
    %41 = vector.multi_reduction <add>, %40, %cst_16 [0] : vector<8x128xf32> to vector<128xf32>
    %42 = vector.shape_cast %41 : vector<128xf32> to vector<1x128xf32>
    %cst_17 = arith.constant 1.250000e-01 : f32
    %43 = vector.broadcast %cst_17 : f32 to vector<1x128xf32>
    %44 = arith.mulf %39, %43 : vector<1x128xf32>
    %cst_18 = arith.constant 1.250000e-01 : f32
    %45 = vector.broadcast %cst_18 : f32 to vector<1x128xf32>
    %46 = arith.mulf %42, %45 : vector<1x128xf32>
    %47 = arith.mulf %44, %44 : vector<1x128xf32>
    %48 = arith.subf %46, %47 : vector<1x128xf32>
    %cst_19 = arith.constant 0.000000e+00 : f32
    %49 = vector.broadcast %cst_19 : f32 to vector<1x128xf32>
    %50 = arith.maximumf %48, %49 : vector<1x128xf32>
    %cst_20 = arith.constant 9.99999974E-6 : f32
    %51 = vector.broadcast %cst_20 : f32 to vector<1x128xf32>
    %52 = arith.addf %50, %51 : vector<1x128xf32>
    %53 = math.rsqrt %52 : vector<1x128xf32>
    %54 = arith.mulf %5, %53 : vector<1x128xf32>
    %55 = arith.mulf %44, %54 : vector<1x128xf32>
    %56 = arith.subf %6, %55 : vector<1x128xf32>
    %57 = vector.broadcast %54 : vector<1x128xf32> to vector<8x128xf32>
    %58 = arith.mulf %37, %57 : vector<8x128xf32>
    %59 = vector.broadcast %56 : vector<1x128xf32> to vector<8x128xf32>
    %60 = arith.addf %58, %59 : vector<8x128xf32>
    %cst_21 = arith.constant 0.000000e+00 : f32
    %61 = vector.broadcast %cst_21 : f32 to vector<8x128xf32>
    %62 = arith.maximumf %60, %61 : vector<8x128xf32>
    %63 = arith.truncf %62 : vector<8x128xf32> to vector<8x128xbf16>
    %c0_22 = arith.constant 0 : index
    %c0_23 = arith.constant 0 : index
    %64 = vector.load %arg3[%c0_22, %c0_23] : memref<128x128xbf16, #tpu.memory_space<vmem>>, vector<128x128xbf16>
    %cst_24 = arith.constant dense<0.000000e+00> : vector<8x128xf32>
    %65 = tpu.matmul %63, %64, %cst_24 {dimension_numbers = #tpu.dot_dimension_numbers<[1], [0], [0], [1], [0, 0, 1, 1], [], []>} : vector<8x128xbf16>, vector<128x128xbf16>, vector<8x128xf32> -> vector<8x128xf32>
    %66 = vector.broadcast %7 : vector<1x128xf32> to vector<8x128xf32>
    %67 = arith.addf %65, %66 : vector<8x128xf32>
    %c0_25 = arith.constant 0 : index
    %c0_26 = arith.constant 0 : index
    %68 = vector.load %arg5[%c0_25, %c0_26] : memref<8x128xf32, #tpu.memory_space<vmem>>, vector<8x128xf32>
    tpu.vector_store %arg5[%c0_25, %c0_26], %67 {strides = array<i32>} : memref<8x128xf32, #tpu.memory_space<vmem>>, vector<8x128xf32>,
    return
  }
}

</mosaic_0001>

<llo_original>
// kernel: mlp_init_forward.1
$region0: #{mlp_init_forward.1}
  #allocation0 [shape = 'u32[]', space=smem, size = 0x4, offset = 0x4, fixed_abs, tag = 'smem constant byte address 0x4 - core index']
  #allocation1 [shape = 'u32[144,128]{1,0:T(1,128)}', space=vmem, size = 0x12000, scoped, tag = 'internal scratch']
  %s0 = inlined_call_operand.hbm [shape: f32[8,16], index: 0, kind: input, shape index: {}]
  %s1 = inlined_call_operand.hbm [shape: bf16[16,128], index: 1, kind: input, shape index: {}]
  %s2 = inlined_call_operand.hbm [shape: bf16[128,128], index: 2, kind: input, shape index: {}]
  %s3 = inlined_call_operand.hbm [shape: bf16[128,128], index: 3, kind: input, shape index: {}]
  %s4 = inlined_call_operand.vmem [shape: f32[8,128], index: 4, kind: input, shape index: {}]
  %s5 = inlined_call_operand.hbm [shape: f32[8,128], index: 5, kind: output, shape index: {}]
  %s6 = sld [smem:[#allocation0]]
  $region46: #{mlp_init_forward.1} parent=0
    _
  %s8 = ssub.s32 1, %s6
  %s9 = scalar_select 0, %s8, %s6
  $region1: #{mlp_init_forward.1} parent=0
    #allocation2 [shape = 'u8[4096]{0}', space=vmem, size = 0x1000, scoped, tag = 'input window, operand 0, single buffered']
    #allocation3 [shape = 's32[1]{0}', space=sflag, size = 0x4, scoped, tag = 'scoped memory for mlp_init_forward.1']
    #allocation4 [shape = 's32[1]{0}', space=sflag, size = 0x4, scoped, tag = 'scoped memory for mlp_init_forward.1']
    #allocation5 [shape = 'u8[4096]{0}', space=vmem, size = 0x1000, scoped, tag = 'input window, operand 1, single buffered']
    #allocation6 [shape = 's32[1]{0}', space=sflag, size = 0x4, scoped, tag = 'scoped memory for mlp_init_forward.1']
    #allocation7 [shape = 'u8[32768]{0}', space=vmem, size = 0x8000, scoped, tag = 'input window, operand 2, single buffered']
    #allocation8 [shape = 'u8[32768]{0}', space=vmem, size = 0x8000, scoped, tag = 'input window, operand 3, single buffered']
    #allocation9 [shape = 's32[1]{0}', space=sflag, size = 0x4, scoped, tag = 'scoped memory for mlp_init_forward.1']
    #allocation10 [shape = 'u8[4096]{0}', space=vmem, size = 0x1000, scoped, tag = 'output window, operand 0, single buffered']
    %10 = vsyncpa [#allocation3], 0
    %11 = vsyncpa [#allocation6], 0
    %12 = vsyncpa [#allocation9], 0
    %13 = vsyncpa [#allocation4], 0
    // Predicated region
    $region2: #{mlp_init_forward.1} parent=1 // pred_check
      _
    $region3: #{mlp_init_forward.1} parent=1 // pred_check_branch
      %15 = sbr.rel (0) target = $region5
    $region4: #{mlp_init_forward.1} parent=1 // pred_region
      %s17 = ssub.s32 128, 128
      %18 = vsyncadd [#allocation3], %s17
      %s20 = sshll.u32 [#allocation2], 4
      %s21 = int_to_ptr.vmem [resolvable:$true] %s20
      %23 = dma.hbm_to_vmem [thread:$0]  %s0, 128, %s21, [#allocation3]
    $region5: #{mlp_init_forward.1} parent=1 // pred_fallthru
      _
    // Predicated region
    $region6: #{mlp_init_forward.1} parent=1 // pred_check
      _
    $region7: #{mlp_init_forward.1} parent=1 // pred_check_branch
      %25 = sbr.rel (0) target = $region9
    $region8: #{mlp_init_forward.1} parent=1 // pred_region
      %s27 = ssub.s32 128, 128
      %28 = vsyncadd [#allocation6], %s27
      %s29 = sshll.u32 [#allocation5], 4
      %s30 = int_to_ptr.vmem [resolvable:$true] %s29
      %35 = dma.hbm_to_vmem [thread:$0]  %s1, 128, %s30, [#allocation6], 64, 64, 4
    $region9: #{mlp_init_forward.1} parent=1 // pred_fallthru
      _
    // Predicated region
    $region10: #{mlp_init_forward.1} parent=1 // pred_check
      _
    $region11: #{mlp_init_forward.1} parent=1 // pred_check_branch
      %37 = sbr.rel (0) target = $region13
    $region12: #{mlp_init_forward.1} parent=1 // pred_region
      %s39 = ssub.s32 1024, 1024
      %40 = vsyncadd [#allocation6], %s39
      %s41 = sshll.u32 [#allocation7], 4
      %s42 = int_to_ptr.vmem [resolvable:$true] %s41
      %47 = dma.hbm_to_vmem [thread:$0]  %s2, 1024, %s42, [#allocation6], 64, 64, 4
    $region13: #{mlp_init_forward.1} parent=1 // pred_fallthru
      _
    // Predicated region
    $region14: #{mlp_init_forward.1} parent=1 // pred_check
      _
    $region15: #{mlp_init_forward.1} parent=1 // pred_check_branch
      %49 = sbr.rel (0) target = $region17
    $region16: #{mlp_init_forward.1} parent=1 // pred_region
      %s51 = ssub.s32 1024, 1024
      %52 = vsyncadd [#allocation9], %s51
      %s53 = sshll.u32 [#allocation8], 4
      %s54 = int_to_ptr.vmem [resolvable:$true] %s53
      %59 = dma.hbm_to_vmem [thread:$0]  %s3, 1024, %s54, [#allocation9], 64, 64, 4
    $region17: #{mlp_init_forward.1} parent=1 // pred_fallthru
      _
    // Predicated region
    $region18: #{mlp_init_forward.1} parent=1 // pred_check
      _
    $region19: #{mlp_init_forward.1} parent=1 // pred_check_branch
      %61 = sbr.rel (0) target = $region21
    $region20: #{mlp_init_forward.1} parent=1 // pred_region
      _
    $region21: #{mlp_init_forward.1} parent=1 // pred_fallthru
      _
    // Predicated region
    $region22: #{mlp_init_forward.1} parent=1 // pred_check
      _
    $region23: #{mlp_init_forward.1} parent=1 // pred_check_branch
      %63 = sbr.rel (0) target = $region25
    $region24: #{mlp_init_forward.1} parent=1 // pred_region
      %64 = dma.done [#allocation3], 128
    $region25: #{mlp_init_forward.1} parent=1 // pred_fallthru
      _
    // Predicated region
    $region26: #{mlp_init_forward.1} parent=1 // pred_check
      _
    $region27: #{mlp_init_forward.1} parent=1 // pred_check_branch
      %66 = sbr.rel (0) target = $region29
    $region28: #{mlp_init_forward.1} parent=1 // pred_region
      %67 = dma.done [#allocation6], 128
    $region29: #{mlp_init_forward.1} parent=1 // pred_fallthru
      _
    // Predicated region
    $region30: #{mlp_init_forward.1} parent=1 // pred_check
      _
    $region31: #{mlp_init_forward.1} parent=1 // pred_check_branch
      %69 = sbr.rel (0) target = $region33
    $region32: #{mlp_init_forward.1} parent=1 // pred_region
      %70 = dma.done [#allocation6], 1024
    $region33: #{mlp_init_forward.1} parent=1 // pred_fallthru
      _
    // Predicated region
    $region34: #{mlp_init_forward.1} parent=1 // pred_check
      _
    $region35: #{mlp_init_forward.1} parent=1 // pred_check_branch
      %72 = sbr.rel (0) target = $region37
    $region36: #{mlp_init_forward.1} parent=1 // pred_region
      %73 = dma.done [#allocation9], 1024
    $region37: #{mlp_init_forward.1} parent=1 // pred_fallthru
      _
    %v75 = vld [vmem:[#allocation2] sm:$0xff]
    %v76 = vpack.c.bf16 %v75, %v75
    %v77 = vld [vmem:[%s4] sm:$0xff]
    %v78 = vld [vmem:[#allocation5] sm:$0xf]
    %v79 = vld [vmem:[#allocation5 + $0x4] sm:$0xf]
    %v82 = vunpack.c.l.b16 %v78
    %v83 = vunpack.c.l.b16 %v79
    %v84 = vpack.c.b16 %v83, %v82
    %vm86 = vcmask 130048
    %v88 = vsel %vm86, %v76, 0
    %90 = vmatprep.subr.bf16.mxu0 0
    %91 = vmatpush1.bf16.msra.mxu0 %v84
    %92 = vmatprep.subr.bf16.mxu0 0
    %93 = vmatpush1.bf16.msra.mxu0 0
    %94 = vmatprep.subr.bf16.mxu0 0
    %95 = vmatpush1.bf16.msra.mxu0 0
    %96 = vmatprep.subr.bf16.mxu0 0
    %97 = vmatpush1.bf16.msra.mxu0 0
    %98 = vmatprep.subr.bf16.mxu0 0
    %99 = vmatpush1.bf16.msra.mxu0 0
    %100 = vmatprep.subr.bf16.mxu0 0
    %101 = vmatpush1.bf16.msra.mxu0 0
    %102 = vmatprep.subr.bf16.mxu0 0
    %103 = vmatpush1.bf16.msra.mxu0 0
    %104 = vmatprep.subr.bf16.mxu0 0
    %105 = vmatpush1.bf16.msra.mxu0 0
    %106 = vmatprep.subr.bf16.mxu0 0
    %107 = vmatpush1.bf16.msra.mxu0 0
    %108 = vmatprep.subr.bf16.mxu0 0
    %109 = vmatpush1.bf16.msra.mxu0 0
    %110 = vmatprep.subr.bf16.mxu0 0
    %111 = vmatpush1.bf16.msra.mxu0 0
    %112 = vmatprep.subr.bf16.mxu0 0
    %113 = vmatpush1.bf16.msra.mxu0 0
    %114 = vmatprep.subr.bf16.mxu0 0
    %115 = vmatpush1.bf16.msra.mxu0 0
    %116 = vmatprep.subr.bf16.mxu0 0
    %117 = vmatpush1.bf16.msra.mxu0 0
    %118 = vmatprep.subr.bf16.mxu0 0
    %119 = vmatpush1.bf16.msra.mxu0 0
    %120 = vmatprep.subr.bf16.mxu0 0
    %121 = vmatpush1.bf16.msra.mxu0 0
    %122 = vmatprep.mubr.bf16.mxu0 0
    %123 = vmatmul.mubr.bf16.gmra.mrb[0].mxu0 %v88
    %v124 = vpop.f32.mrb[0].mxu0
    %v125 = vadd.f32 0.0, %v124
    %v126 = vpop.f32.mrb[0].mxu0
    %v127 = vpop.f32.mrb[0].mxu0
    %v128 = vpop.f32.mrb[0].mxu0
    %129 = vdwg.mxu0
    %v130 = vrot.slane %v125, 4
    %v131 = vadd.f32 %v125, %v130
    %v132 = vrot.slane %v131, 2
    %v133 = vadd.f32 %v131, %v132
    %v134 = vrot.slane %v133, 1
    %v135 = vadd.f32 %v133, %v134
    %v136 = vmul.f32 %v125, %v125
    %v137 = vrot.slane %v136, 4
    %v138 = vadd.f32 %v136, %v137
    %v139 = vrot.slane %v138, 2
    %v140 = vadd.f32 %v138, %v139
    %v141 = vrot.slane %v140, 1
    %v142 = vadd.f32 %v140, %v141
    %v143 = vmul.f32 %v135, 0.125
    %v144 = vmul.f32 %v142, 0.125
    %v145 = vmul.f32 %v143, %v143
    %v146 = vsub.f32 %v144, %v145
    %v147 = vmax.f32 %v146, 0.0
    %v148 = vadd.f32 %v147, 1e-05
    %v149 = vrsqrt.pop %v148
    %v150 = vmul.f32 %v77, %v149
    %v151 = vmul.f32 %v143, %v150
    %v153 = vrot.slane %v151, 7
    %v155 = vsub.f32 %v77, %v153
    %v156 = vlaneseq
    %v157 = vshrl.u32 %v156, 7
    %v158 = vsub.s32 0, %v157
    %v159 = vrot.slane %v150, %v158
    %v160 = vmul.f32 %v125, %v159
    %v161 = vlaneseq
    %v162 = vshrl.u32 %v161, 7
    %v163 = vsub.s32 1, %v162
    %v164 = vrot.slane %v155, %v163
    %v165 = vadd.f32 %v160, %v164
    %v166 = vmax.f32 %v165, 0.0
    %v167 = vpack.c.bf16 %v166, %v166
    %v168 = vld [vmem:[#allocation7] sm:$0xf]
    %v169 = vld [vmem:[#allocation7 + $0x4] sm:$0xf]
    %v170 = vld [vmem:[#allocation7 + $0x8] sm:$0xf]
    %v171 = vld [vmem:[#allocation7 + $0xc] sm:$0xf]
    %v172 = vld [vmem:[#allocation7 + $0x10] sm:$0xf]
    %v173 = vld [vmem:[#allocation7 + $0x14] sm:$0xf]
    %v174 = vld [vmem:[#allocation7 + $0x18] sm:$0xf]
    %v175 = vld [vmem:[#allocation7 + $0x1c] sm:$0xf]
    %v176 = vld [vmem:[#allocation7 + $0x20] sm:$0xf]
    %v177 = vld [vmem:[#allocation7 + $0x24] sm:$0xf]
    %v178 = vld [vmem:[#allocation7 + $0x28] sm:$0xf]
    %v179 = vld [vmem:[#allocation7 + $0x2c] sm:$0xf]
    %v180 = vld [vmem:[#allocation7 + $0x30] sm:$0xf]
    %v181 = vld [vmem:[#allocation7 + $0x34] sm:$0xf]
    %v182 = vld [vmem:[#allocation7 + $0x38] sm:$0xf]
    %v183 = vld [vmem:[#allocation7 + $0x3c] sm:$0xf]
    %v200 = vunpack.c.l.b16 %v168
    %v201 = vunpack.c.l.b16 %v169
    %v202 = vunpack.c.l.b16 %v170
    %v203 = vunpack.c.l.b16 %v171
    %v204 = vunpack.c.l.b16 %v172
    %v205 = vunpack.c.l.b16 %v173
    %v206 = vunpack.c.l.b16 %v174
    %v207 = vunpack.c.l.b16 %v175
    %v208 = vunpack.c.l.b16 %v176
    %v209 = vunpack.c.l.b16 %v177
    %v210 = vunpack.c.l.b16 %v178
    %v211 = vunpack.c.l.b16 %v179
    %v212 = vunpack.c.l.b16 %v180
    %v213 = vunpack.c.l.b16 %v181
    %v214 = vunpack.c.l.b16 %v182
    %v215 = vunpack.c.l.b16 %v183
    %v216 = vpack.c.b16 %v201, %v200
    %v217 = vpack.c.b16 %v203, %v202
    %v218 = vpack.c.b16 %v205, %v204
    %v219 = vpack.c.b16 %v207, %v206
    %v220 = vpack.c.b16 %v209, %v208
    %v221 = vpack.c.b16 %v211, %v210
    %v222 = vpack.c.b16 %v213, %v212
    %v223 = vpack.c.b16 %v215, %v214
    %232 = vmatprep.subr.bf16.mxu0 0
    %233 = vmatpush1.bf16.msra.mxu0 %v216
    %234 = vmatprep.subr.bf16.mxu0 0
    %235 = vmatpush1.bf16.msra.mxu0 %v217
    %236 = vmatprep.subr.bf16.mxu0 0
    %237 = vmatpush1.bf16.msra.mxu0 %v218
    %238 = vmatprep.subr.bf16.mxu0 0
    %239 = vmatpush1.bf16.msra.mxu0 %v219
    %240 = vmatprep.subr.bf16.mxu0 0
    %241 = vmatpush1.bf16.msra.mxu0 %v220
    %242 = vmatprep.subr.bf16.mxu0 0
    %243 = vmatpush1.bf16.msra.mxu0 %v221
    %244 = vmatprep.subr.bf16.mxu0 0
    %245 = vmatpush1.bf16.msra.mxu0 %v222
    %246 = vmatprep.subr.bf16.mxu0 0
    %247 = vmatpush1.bf16.msra.mxu0 %v223
    %248 = vmatprep.subr.bf16.mxu0 0
    %249 = vmatpush1.bf16.msra.mxu0 0
    %250 = vmatprep.subr.bf16.mxu0 0
    %251 = vmatpush1.bf16.msra.mxu0 0
    %252 = vmatprep.subr.bf16.mxu0 0
    %253 = vmatpush1.bf16.msra.mxu0 0
    %254 = vmatprep.subr.bf16.mxu0 0
    %255 = vmatpush1.bf16.msra.mxu0 0
    %256 = vmatprep.subr.bf16.mxu0 0
    %257 = vmatpush1.bf16.msra.mxu0 0
    %258 = vmatprep.subr.bf16.mxu0 0
    %259 = vmatpush1.bf16.msra.mxu0 0
    %260 = vmatprep.subr.bf16.mxu0 0
    %261 = vmatpush1.bf16.msra.mxu0 0
    %262 = vmatprep.subr.bf16.mxu0 0
    %263 = vmatpush1.bf16.msra.mxu0 0
    %264 = vmatprep.mubr.bf16.mxu0 0
    %265 = vmatmul.mubr.bf16.gmra.mrb[0].mxu0 %v167
    %v266 = vpop.f32.mrb[0].mxu0
    %v267 = vadd.f32 0.0, %v266
    %v268 = vpop.f32.mrb[0].mxu0
    %v269 = vpop.f32.mrb[0].mxu0
    %v270 = vpop.f32.mrb[0].mxu0
    %271 = vdwg.mxu0
    %v272 = vrot.slane %v267, 4
    %v273 = vadd.f32 %v267, %v272
    %v274 = vrot.slane %v273, 2
    %v275 = vadd.f32 %v273, %v274
    %v276 = vrot.slane %v275, 1
    %v277 = vadd.f32 %v275, %v276
    %v278 = vmul.f32 %v267, %v267
    %v279 = vrot.slane %v278, 4
    %v280 = vadd.f32 %v278, %v279
    %v281 = vrot.slane %v280, 2
    %v282 = vadd.f32 %v280, %v281
    %v283 = vrot.slane %v282, 1
    %v284 = vadd.f32 %v282, %v283
    %v285 = vmul.f32 %v277, 0.125
    %v286 = vmul.f32 %v284, 0.125
    %v287 = vmul.f32 %v285, %v285
    %v288 = vsub.f32 %v286, %v287
    %v289 = vmax.f32 %v288, 0.0
    %v290 = vadd.f32 %v289, 1e-05
    %v291 = vrsqrt.pop %v290
    %v292 = vmul.f32 %v77, %v291
    %v293 = vmul.f32 %v285, %v292
    %v295 = vrot.slane %v293, 7
    %v297 = vsub.f32 %v77, %v295
    %v298 = vlaneseq
    %v299 = vshrl.u32 %v298, 7
    %v300 = vsub.s32 2, %v299
    %v301 = vrot.slane %v292, %v300
    %v302 = vmul.f32 %v267, %v301
    %v303 = vlaneseq
    %v304 = vshrl.u32 %v303, 7
    %v305 = vsub.s32 3, %v304
    %v306 = vrot.slane %v297, %v305
    %v307 = vadd.f32 %v302, %v306
    %v308 = vmax.f32 %v307, 0.0
    %v309 = vpack.c.bf16 %v308, %v308
    %v310 = vld [vmem:[#allocation8] sm:$0xf]
    %v311 = vld [vmem:[#allocation8 + $0x4] sm:$0xf]
    %v312 = vld [vmem:[#allocation8 + $0x8] sm:$0xf]
    %v313 = vld [vmem:[#allocation8 + $0xc] sm:$0xf]
    %v314 = vld [vmem:[#allocation8 + $0x10] sm:$0xf]
    %v315 = vld [vmem:[#allocation8 + $0x14] sm:$0xf]
    %v316 = vld [vmem:[#allocation8 + $0x18] sm:$0xf]
    %v317 = vld [vmem:[#allocation8 + $0x1c] sm:$0xf]
    %v318 = vld [vmem:[#allocation8 + $0x20] sm:$0xf]
    %v319 = vld [vmem:[#allocation8 + $0x24] sm:$0xf]
    %v320 = vld [vmem:[#allocation8 + $0x28] sm:$0xf]
    %v321 = vld [vmem:[#allocation8 + $0x2c] sm:$0xf]
    %v322 = vld [vmem:[#allocation8 + $0x30] sm:$0xf]
    %v323 = vld [vmem:[#allocation8 + $0x34] sm:$0xf]
    %v324 = vld [vmem:[#allocation8 + $0x38] sm:$0xf]
    %v325 = vld [vmem:[#allocation8 + $0x3c] sm:$0xf]
    %v326 = vlaneseq
    %v327 = vshrl.u32 %v326, 7
    %v328 = vsub.s32 4, %v327
    %v329 = vrot.slane %v77, %v328
    %v346 = vunpack.c.l.b16 %v310
    %v347 = vunpack.c.l.b16 %v311
    %v348 = vunpack.c.l.b16 %v312
    %v349 = vunpack.c.l.b16 %v313
    %v350 = vunpack.c.l.b16 %v314
    %v351 = vunpack.c.l.b16 %v315
    %v352 = vunpack.c.l.b16 %v316
    %v353 = vunpack.c.l.b16 %v317
    %v354 = vunpack.c.l.b16 %v318
    %v355 = vunpack.c.l.b16 %v319
    %v356 = vunpack.c.l.b16 %v320
    %v357 = vunpack.c.l.b16 %v321
    %v358 = vunpack.c.l.b16 %v322
    %v359 = vunpack.c.l.b16 %v323
    %v360 = vunpack.c.l.b16 %v324
    %v361 = vunpack.c.l.b16 %v325
    %v362 = vpack.c.b16 %v347, %v346
    %v363 = vpack.c.b16 %v349, %v348
    %v364 = vpack.c.b16 %v351, %v350
    %v365 = vpack.c.b16 %v353, %v352
    %v366 = vpack.c.b16 %v355, %v354
    %v367 = vpack.c.b16 %v357, %v356
    %v368 = vpack.c.b16 %v359, %v358
    %v369 = vpack.c.b16 %v361, %v360
    %378 = vmatprep.subr.bf16.mxu0 0
    %379 = vmatpush1.bf16.msra.mxu0 %v362
    %380 = vmatprep.subr.bf16.mxu0 0
    %381 = vmatpush1.bf16.msra.mxu0 %v363
    %382 = vmatprep.subr.bf16.mxu0 0
    %383 = vmatpush1.bf16.msra.mxu0 %v364
    %384 = vmatprep.subr.bf16.mxu0 0
    %385 = vmatpush1.bf16.msra.mxu0 %v365
    %386 = vmatprep.subr.bf16.mxu0 0
    %387 = vmatpush1.bf16.msra.mxu0 %v366
    %388 = vmatprep.subr.bf16.mxu0 0
    %389 = vmatpush1.bf16.msra.mxu0 %v367
    %390 = vmatprep.subr.bf16.mxu0 0
    %391 = vmatpush1.bf16.msra.mxu0 %v368
    %392 = vmatprep.subr.bf16.mxu0 0
    %393 = vmatpush1.bf16.msra.mxu0 %v369
    %394 = vmatprep.subr.bf16.mxu0 0
    %395 = vmatpush1.bf16.msra.mxu0 0
    %396 = vmatprep.subr.bf16.mxu0 0
    %397 = vmatpush1.bf16.msra.mxu0 0
    %398 = vmatprep.subr.bf16.mxu0 0
    %399 = vmatpush1.bf16.msra.mxu0 0
    %400 = vmatprep.subr.bf16.mxu0 0
    %401 = vmatpush1.bf16.msra.mxu0 0
    %402 = vmatprep.subr.bf16.mxu0 0
    %403 = vmatpush1.bf16.msra.mxu0 0
    %404 = vmatprep.subr.bf16.mxu0 0
    %405 = vmatpush1.bf16.msra.mxu0 0
    %406 = vmatprep.subr.bf16.mxu0 0
    %407 = vmatpush1.bf16.msra.mxu0 0
    %408 = vmatprep.subr.bf16.mxu0 0
    %409 = vmatpush1.bf16.msra.mxu0 0
    %410 = vmatprep.mubr.bf16.mxu0 0
    %411 = vmatmul.mubr.bf16.gmra.mrb[0].mxu0 %v309
    %v412 = vpop.f32.mrb[0].mxu0
    %v413 = vadd.f32 %v329, %v412
    %v414 = vpop.f32.mrb[0].mxu0
    %v415 = vpop.f32.mrb[0].mxu0
    %v416 = vpop.f32.mrb[0].mxu0
    %417 = vdwg.mxu0
    %418 = vst [vmem:[#allocation10] sm:$0xff] %v413
    // Predicated region
    $region38: #{mlp_init_forward.1} parent=1 // pred_check
      _
    $region39: #{mlp_init_forward.1} parent=1 // pred_check_branch
      %420 = sbr.rel (0) target = $region41
    $region40: #{mlp_init_forward.1} parent=1 // pred_region
      %s422 = ssub.s32 128, 128
      %423 = vsyncadd [#allocation4], %s422
      %s425 = sshll.u32 [#allocation10], 4
      %s426 = int_to_ptr.vmem [resolvable:$true] %s425
      %428 = dma.vmem_to_hbm [thread:$0]  %s426, 128, %s5, [#allocation4]
    $region41: #{mlp_init_forward.1} parent=1 // pred_fallthru
      _
    // Predicated region
    $region42: #{mlp_init_forward.1} parent=1 // pred_check
      _
    $region43: #{mlp_init_forward.1} parent=1 // pred_check_branch
      %430 = sbr.rel (0) target = $region45
    $region44: #{mlp_init_forward.1} parent=1 // pred_region
      %431 = dma.done [#allocation4], 128
    $region45: #{mlp_init_forward.1} parent=1 // pred_fallthru
      _
    %432 = vsyncpa [#allocation3], 1
    %433 = vsyncpa [#allocation6], 1
    %434 = vsyncpa [#allocation9], 1
    %435 = vsyncpa [#allocation4], 1

</llo_original>
